<compile_context>
chip_gen: v7x
topology: tpu7x:2x2x1
jax: 0.10.0
libtpu: 0.0.40
codegen_flags: <defaults>
</compile_context>

<pallas_src>
import math
import functools

import jax
import jax.numpy as jnp
from jax.experimental import pallas as pl
from jax.experimental.pallas import tpu as pltpu


_VMEM = functools.partial(pl.BlockSpec, memory_space=pltpu.MemorySpace.VMEM)


# ----------------------------- Pallas kernels ------------------------------

def inconv_score_kernel(a_hat_ref, a_ref, x_ref, w_ref, b_ref,
                        wpack_ref, brel_ref, h_ref, s_ref):
    # Fused: h = relu(A_hat @ (X @ W) + b)            (GCNConv + ReLU)
    #        hw = h @ [w_rel | w_root]        [N, 2]  (reassociated GraphConv)
    #        score = tanh(A @ hw[:, :1] + b_rel + hw[:, 1:2])
    xw = jnp.dot(x_ref[...], w_ref[...], preferred_element_type=jnp.float32)
    h = jnp.maximum(
        jnp.dot(a_hat_ref[...], xw, preferred_element_type=jnp.float32)
        + b_ref[...], 0.0)
    h_ref[...] = h
    hw = jnp.dot(h, wpack_ref[...], preferred_element_type=jnp.float32)
    rel = jnp.dot(a_ref[...], hw[:, 0:1], preferred_element_type=jnp.float32)
    s_ref[...] = jnp.tanh(rel + brel_ref[...] + hw[:, 1:2])


def scale_score_kernel(a_ref, x_ref, sin_ref, wpack_ref, brel_ref,
                       h_ref, s_ref):
    # Fused: h_pooled = x[perm] * score[perm]         (SAGPooling scaling, mult=1)
    #        score_next = tanh(A_pooled @ (h_pooled @ w_rel) + b_rel
    #                          + h_pooled @ w_root)   (next pool's GraphConv score)
    hp = x_ref[...] * sin_ref[...]
    h_ref[...] = hp
    hw = jnp.dot(hp, wpack_ref[...], preferred_element_type=jnp.float32)
    rel = jnp.dot(a_ref[...], hw[:, 0:1], preferred_element_type=jnp.float32)
    s_ref[...] = jnp.tanh(rel + brel_ref[...] + hw[:, 1:2])


def scale_outconv_kernel(a_hat_ref, x_ref, sin_ref, w_ref, b_ref, o_ref):
    # Fused: h_pooled = x[perm] * score[perm]
    #        out = relu(A_hat_out @ (h_pooled @ W_out) + b_out)
    hp = x_ref[...] * sin_ref[...]
    hw = jnp.dot(hp, w_ref[...], preferred_element_type=jnp.float32)
    o_ref[...] = jnp.maximum(
        jnp.dot(a_hat_ref[...], hw, preferred_element_type=jnp.float32)
        + b_ref[...], 0.0)


# ----------------------------- kernel wrappers ------------------------------

def inconv_and_score(a_hat, a, x, w, b, wpack, b_rel):
    n = x.shape[0]
    c = w.shape[1]
    return pl.pallas_call(
        inconv_score_kernel,
        out_shape=(jax.ShapeDtypeStruct((n, c), jnp.float32),
                   jax.ShapeDtypeStruct((n, 1), jnp.float32)),
        in_specs=[_VMEM()] * 7,
        out_specs=(_VMEM(), _VMEM()),
    )(a_hat, a, x, w, b.reshape(1, -1), wpack, b_rel.reshape(1, 1))


def scale_and_score(a, x, s, wpack, b_rel):
    n, c = x.shape
    return pl.pallas_call(
        scale_score_kernel,
        out_shape=(jax.ShapeDtypeStruct((n, c), jnp.float32),
                   jax.ShapeDtypeStruct((n, 1), jnp.float32)),
        in_specs=[_VMEM()] * 5,
        out_specs=(_VMEM(), _VMEM()),
    )(a, x, s, wpack, b_rel.reshape(1, 1))


def scale_and_outconv(a_hat, x, s, w, b):
    n = x.shape[0]
    c_out = w.shape[1]
    return pl.pallas_call(
        scale_outconv_kernel,
        out_shape=jax.ShapeDtypeStruct((n, c_out), jnp.float32),
        in_specs=[_VMEM()] * 5,
        out_specs=_VMEM(),
    )(a_hat, x, s, w, b.reshape(1, -1))


# ------------------------------ JAX glue ------------------------------------

def gcn_norm_adj(edge_index, num_nodes):
    """Dense GCN-normalized adjacency with self loops: A_hat[dst, src]."""
    src, dst = edge_index[0], edge_index[1]
    loop = jnp.arange(num_nodes, dtype=src.dtype)
    src = jnp.concatenate([src, loop])
    dst = jnp.concatenate([dst, loop])
    w = jnp.ones(src.shape, jnp.float32)
    deg = jnp.zeros((num_nodes,), jnp.float32).at[dst].add(w)
    dinv = jnp.where(deg > 0, 1.0 / jnp.sqrt(deg), 0.0)
    norm = dinv[src] * dinv[dst] * w
    return jnp.zeros((num_nodes, num_nodes), jnp.float32).at[dst, src].add(norm)


def plain_adj(edge_index, num_nodes):
    """Dense un-normalized adjacency (no self loops): A[dst, src]."""
    src, dst = edge_index[0], edge_index[1]
    w = jnp.ones(src.shape, jnp.float32)
    return jnp.zeros((num_nodes, num_nodes), jnp.float32).at[dst, src].add(w)


def init_params(key, in_channels, inner_dim, out_channels, pools):
    keys = jax.random.split(key, 4 + 3 * pools)
    params = {
        "in_w": jax.random.normal(keys[0], (in_channels, inner_dim), jnp.float32) * 0.1,
        "in_b": jax.random.normal(keys[1], (inner_dim,), jnp.float32) * 0.1,
        "out_w": jax.random.normal(keys[2], (inner_dim, out_channels), jnp.float32) * 0.1,
        "out_b": jax.random.normal(keys[3], (out_channels,), jnp.float32) * 0.1,
        "pools": [],
    }
    for p in range(pools):
        k0, k1, k2 = keys[4 + 3 * p], keys[5 + 3 * p], keys[6 + 3 * p]
        params["pools"].append({
            "w_rel": jax.random.normal(k0, (inner_dim, 1), jnp.float32) * 0.1,
            "b_rel": jax.random.normal(k1, (1,), jnp.float32) * 0.1,
            "w_root": jax.random.normal(k2, (inner_dim, 1), jnp.float32) * 0.1,
        })
    return params


@functools.partial(jax.jit, static_argnames=("ratio",))
def graph_encoder_forward(params, x, edge_index, out_index, ratio=0.5):
    num_nodes = x.shape[0]
    n_pools = len(params["pools"])

    # Dense adjacency builds (scatter) — plain JAX, fused into the same jit.
    a_hat = gcn_norm_adj(edge_index, num_nodes)
    a = plain_adj(edge_index, num_nodes)

    # Fused in_conv (GCNConv+ReLU) + pool-0 score.
    p0 = params["pools"][0]
    wpack0 = jnp.concatenate([p0["w_rel"], p0["w_root"]], axis=1)
    h, score = inconv_and_score(a_hat, a, x, params["in_w"], params["in_b"],
                                wpack0, p0["b_rel"])

    n = num_nodes
    out = None
    for p in range(n_pools):
        k = int(math.ceil(ratio * n))
        # TODO(synk): top-k node selection + edge filtering (data-dependent
        # gather) stay in plain JAX; lax.top_k tie-break may differ from torch.
        _, perm = jax.lax.top_k(score[:, 0], k)
        h_sel = h[perm]
        s_sel = score[perm]
        a = a[perm][:, perm]     # dense equivalent of filter_adj
        n = k
        if p + 1 < n_pools:
            nxt = params["pools"][p + 1]
            wpack = jnp.concatenate([nxt["w_rel"], nxt["w_root"]], axis=1)
            h, score = scale_and_score(a, h_sel, s_sel, wpack, nxt["b_rel"])
        else:
            # out_conv on the pooled graph; out_index is in pooled id space [0, n).
            a_hat_out = gcn_norm_adj(out_index, n)
            out = scale_and_outconv(a_hat_out, h_sel, s_sel,
                                    params["out_w"], params["out_b"])
    return out


# --------------------------------- main --------------------------------------

if __name__ == "__main__":
    IN_CHANNELS = 8
    INNER_DIM = 16
    OUT_CHANNELS = 8
    POOLS = 2
    RATIO = 0.5
    N_NODES = 16          # 16 -> 8 -> 4 nodes after the two poolings
    N_EDGES = 40
    N_POOLED = 4
    N_OUT_EDGES = 8

    key = jax.random.PRNGKey(0)
    k_param, k_x, k_src, k_dst, k_osrc, k_odst = jax.random.split(key, 6)

    params = init_params(k_param, IN_CHANNELS, INNER_DIM, OUT_CHANNELS, POOLS)

    x = jax.random.normal(k_x, (N_NODES, IN_CHANNELS), jnp.float32)
    edge_index = jnp.stack([
        jax.random.randint(k_src, (N_EDGES,), 0, N_NODES),
        jax.random.randint(k_dst, (N_EDGES,), 0, N_NODES),
    ]).astype(jnp.int32)
    out_index = jnp.stack([
        jax.random.randint(k_osrc, (N_OUT_EDGES,), 0, N_POOLED),
        jax.random.randint(k_odst, (N_OUT_EDGES,), 0, N_POOLED),
    ]).astype(jnp.int32)

    out = graph_encoder_forward(params, x, edge_index, out_index, ratio=RATIO)
    out = jax.block_until_ready(out)
    assert out.shape == (N_POOLED, OUT_CHANNELS), out.shape
    assert bool(jnp.all(jnp.isfinite(out)))
    print("KERNEL_OK")
</pallas_src>

<mosaic_0001>
module attributes {stable_mosaic.version = 11 : i64} {
  func.func @inconv_score_kernel(%arg0: memref<16x16xf32, #tpu.memory_space<vmem>>, %arg1: memref<16x16xf32, #tpu.memory_space<vmem>>, %arg2: memref<16x8xf32, #tpu.memory_space<vmem>>, %arg3: memref<8x16xf32, #tpu.memory_space<vmem>>, %arg4: memref<1x16xf32, #tpu.memory_space<vmem>>, %arg5: memref<16x2xf32, #tpu.memory_space<vmem>>, %arg6: memref<1x1xf32, #tpu.memory_space<vmem>>, %arg7: memref<16x16xf32, #tpu.memory_space<vmem>>, %arg8: memref<16x1xf32, #tpu.memory_space<vmem>>) attributes {dimension_semantics = [], scalar_prefetch = 0 : i64, scratch_operands = 0 : i64, tpu.core_type = #tpu.core_type<tc>} {
    %c0 = arith.constant 0 : index
    %c0_0 = arith.constant 0 : index
    %0 = vector.load %arg2[%c0, %c0_0] : memref<16x8xf32, #tpu.memory_space<vmem>>, vector<16x8xf32>
    %c0_1 = arith.constant 0 : index
    %c0_2 = arith.constant 0 : index
    %1 = vector.load %arg3[%c0_1, %c0_2] : memref<8x16xf32, #tpu.memory_space<vmem>>, vector<8x16xf32>
    %cst = arith.constant dense<0.000000e+00> : vector<16x16xf32>
    %2 = tpu.matmul %0, %1, %cst {dimension_numbers = #tpu.dot_dimension_numbers<[1], [0], [0], [1], [0, 0, 1, 1], [], []>} : vector<16x8xf32>, vector<8x16xf32>, vector<16x16xf32> -> vector<16x16xf32>
    %c0_3 = arith.constant 0 : index
    %c0_4 = arith.constant 0 : index
    %3 = vector.load %arg0[%c0_3, %c0_4] : memref<16x16xf32, #tpu.memory_space<vmem>>, vector<16x16xf32>
    %cst_5 = arith.constant dense<0.000000e+00> : vector<16x16xf32>
    %4 = tpu.matmul %3, %2, %cst_5 {dimension_numbers = #tpu.dot_dimension_numbers<[1], [0], [0], [1], [0, 0, 1, 1], [], []>} : vector<16x16xf32>, vector<16x16xf32>, vector<16x16xf32> -> vector<16x16xf32>
    %c0_6 = arith.constant 0 : index
    %c0_7 = arith.constant 0 : index
    %5 = vector.load %arg4[%c0_6, %c0_7] : memref<1x16xf32, #tpu.memory_space<vmem>>, vector<1x16xf32>
    %6 = vector.broadcast %5 : vector<1x16xf32> to vector<16x16xf32>
    %7 = arith.addf %4, %6 : vector<16x16xf32>
    %cst_8 = arith.constant 0.000000e+00 : f32
    %8 = vector.broadcast %cst_8 : f32 to vector<16x16xf32>
    %9 = arith.maximumf %7, %8 : vector<16x16xf32>
    %c0_9 = arith.constant 0 : index
    %c0_10 = arith.constant 0 : index
    %10 = vector.load %arg7[%c0_9, %c0_10] : memref<16x16xf32, #tpu.memory_space<vmem>>, vector<16x16xf32>
    tpu.vector_store %arg7[%c0_9, %c0_10], %9 {strides = array<i32>} : memref<16x16xf32, #tpu.memory_space<vmem>>, vector<16x16xf32>,
    %c0_11 = arith.constant 0 : index
    %c0_12 = arith.constant 0 : index
    %11 = vector.load %arg5[%c0_11, %c0_12] : memref<16x2xf32, #tpu.memory_space<vmem>>, vector<16x2xf32>
    %cst_13 = arith.constant dense<0.000000e+00> : vector<16x2xf32>
    %12 = tpu.matmul %9, %11, %cst_13 {dimension_numbers = #tpu.dot_dimension_numbers<[1], [0], [0], [1], [0, 0, 1, 1], [], []>} : vector<16x16xf32>, vector<16x2xf32>, vector<16x2xf32> -> vector<16x2xf32>
    %c0_14 = arith.constant 0 : index
    %c0_15 = arith.constant 0 : index
    %13 = vector.load %arg1[%c0_14, %c0_15] : memref<16x16xf32, #tpu.memory_space<vmem>>, vector<16x16xf32>
    %14 = vector.extract_strided_slice %12 {offsets = [0, 0], sizes = [16, 1], strides = [1, 1]} : vector<16x2xf32> to vector<16x1xf32>
    %cst_16 = arith.constant dense<0.000000e+00> : vector<16x1xf32>
    %15 = tpu.matmul %13, %14, %cst_16 {dimension_numbers = #tpu.dot_dimension_numbers<[1], [0], [0], [1], [0, 0, 1, 1], [], []>} : vector<16x16xf32>, vector<16x1xf32>, vector<16x1xf32> -> vector<16x1xf32>
    %c0_17 = arith.constant 0 : index
    %c0_18 = arith.constant 0 : index
    %16 = vector.load %arg6[%c0_17, %c0_18] : memref<1x1xf32, #tpu.memory_space<vmem>>, vector<1x1xf32>
    %17 = vector.broadcast %16 : vector<1x1xf32> to vector<16x1xf32>
    %18 = arith.addf %15, %17 : vector<16x1xf32>
    %19 = vector.extract_strided_slice %12 {offsets = [0, 1], sizes = [16, 1], strides = [1, 1]} : vector<16x2xf32> to vector<16x1xf32>
    %20 = arith.addf %18, %19 : vector<16x1xf32>
    %21 = math.tanh %20 : vector<16x1xf32>
    %c0_19 = arith.constant 0 : index
    %c0_20 = arith.constant 0 : index
    %22 = vector.load %arg8[%c0_19, %c0_20] : memref<16x1xf32, #tpu.memory_space<vmem>>, vector<16x1xf32>
    tpu.vector_store %arg8[%c0_19, %c0_20], %21 {strides = array<i32>} : memref<16x1xf32, #tpu.memory_space<vmem>>, vector<16x1xf32>,
    return
  }
}

module attributes {stable_mosaic.version = 11 : i64} {
  func.func @scale_score_kernel(%arg0: memref<8x8xf32, #tpu.memory_space<vmem>>, %arg1: memref<8x16xf32, #tpu.memory_space<vmem>>, %arg2: memref<8x1xf32, #tpu.memory_space<vmem>>, %arg3: memref<16x2xf32, #tpu.memory_space<vmem>>, %arg4: memref<1x1xf32, #tpu.memory_space<vmem>>, %arg5: memref<8x16xf32, #tpu.memory_space<vmem>>, %arg6: memref<8x1xf32, #tpu.memory_space<vmem>>) attributes {dimension_semantics = [], scalar_prefetch = 0 : i64, scratch_operands = 0 : i64, tpu.core_type = #tpu.core_type<tc>} {
    %c0 = arith.constant 0 : index
    %c0_0 = arith.constant 0 : index
    %0 = vector.load %arg1[%c0, %c0_0] : memref<8x16xf32, #tpu.memory_space<vmem>>, vector<8x16xf32>
    %c0_1 = arith.constant 0 : index
    %c0_2 = arith.constant 0 : index
    %1 = vector.load %arg2[%c0_1, %c0_2] : memref<8x1xf32, #tpu.memory_space<vmem>>, vector<8x1xf32>
    %2 = vector.broadcast %1 : vector<8x1xf32> to vector<8x16xf32>
    %3 = arith.mulf %0, %2 : vector<8x16xf32>
    %c0_3 = arith.constant 0 : index
    %c0_4 = arith.constant 0 : index
    %4 = vector.load %arg5[%c0_3, %c0_4] : memref<8x16xf32, #tpu.memory_space<vmem>>, vector<8x16xf32>
    tpu.vector_store %arg5[%c0_3, %c0_4], %3 {strides = array<i32>} : memref<8x16xf32, #tpu.memory_space<vmem>>, vector<8x16xf32>,
    %c0_5 = arith.constant 0 : index
    %c0_6 = arith.constant 0 : index
    %5 = vector.load %arg3[%c0_5, %c0_6] : memref<16x2xf32, #tpu.memory_space<vmem>>, vector<16x2xf32>
    %cst = arith.constant dense<0.000000e+00> : vector<8x2xf32>
    %6 = tpu.matmul %3, %5, %cst {dimension_numbers = #tpu.dot_dimension_numbers<[1], [0], [0], [1], [0, 0, 1, 1], [], []>} : vector<8x16xf32>, vector<16x2xf32>, vector<8x2xf32> -> vector<8x2xf32>
    %c0_7 = arith.constant 0 : index
    %c0_8 = arith.constant 0 : index
    %7 = vector.load %arg0[%c0_7, %c0_8] : memref<8x8xf32, #tpu.memory_space<vmem>>, vector<8x8xf32>
    %8 = vector.extract_strided_slice %6 {offsets = [0, 0], sizes = [8, 1], strides = [1, 1]} : vector<8x2xf32> to vector<8x1xf32>
    %cst_9 = arith.constant dense<0.000000e+00> : vector<8x1xf32>
    %9 = tpu.matmul %7, %8, %cst_9 {dimension_numbers = #tpu.dot_dimension_numbers<[1], [0], [0], [1], [0, 0, 1, 1], [], []>} : vector<8x8xf32>, vector<8x1xf32>, vector<8x1xf32> -> vector<8x1xf32>
    %c0_10 = arith.constant 0 : index
    %c0_11 = arith.constant 0 : index
    %10 = vector.load %arg4[%c0_10, %c0_11] : memref<1x1xf32, #tpu.memory_space<vmem>>, vector<1x1xf32>
    %11 = vector.broadcast %10 : vector<1x1xf32> to vector<8x1xf32>
    %12 = arith.addf %9, %11 : vector<8x1xf32>
    %13 = vector.extract_strided_slice %6 {offsets = [0, 1], sizes = [8, 1], strides = [1, 1]} : vector<8x2xf32> to vector<8x1xf32>
    %14 = arith.addf %12, %13 : vector<8x1xf32>
    %15 = math.tanh %14 : vector<8x1xf32>
    %c0_12 = arith.constant 0 : index
    %c0_13 = arith.constant 0 : index
    %16 = vector.load %arg6[%c0_12, %c0_13] : memref<8x1xf32, #tpu.memory_space<vmem>>, vector<8x1xf32>
    tpu.vector_store %arg6[%c0_12, %c0_13], %15 {strides = array<i32>} : memref<8x1xf32, #tpu.memory_space<vmem>>, vector<8x1xf32>,
    return
  }
}

module attributes {stable_mosaic.version = 11 : i64} {
  func.func @scale_outconv_kernel(%arg0: memref<4x4xf32, #tpu.memory_space<vmem>>, %arg1: memref<4x16xf32, #tpu.memory_space<vmem>>, %arg2: memref<4x1xf32, #tpu.memory_space<vmem>>, %arg3: memref<16x8xf32, #tpu.memory_space<vmem>>, %arg4: memref<1x8xf32, #tpu.memory_space<vmem>>, %arg5: memref<4x8xf32, #tpu.memory_space<vmem>>) attributes {dimension_semantics = [], scalar_prefetch = 0 : i64, scratch_operands = 0 : i64, tpu.core_type = #tpu.core_type<tc>} {
    %c0 = arith.constant 0 : index
    %c0_0 = arith.constant 0 : index
    %0 = vector.load %arg1[%c0, %c0_0] : memref<4x16xf32, #tpu.memory_space<vmem>>, vector<4x16xf32>
    %c0_1 = arith.constant 0 : index
    %c0_2 = arith.constant 0 : index
    %1 = vector.load %arg2[%c0_1, %c0_2] : memref<4x1xf32, #tpu.memory_space<vmem>>, vector<4x1xf32>
    %2 = vector.broadcast %1 : vector<4x1xf32> to vector<4x16xf32>
    %3 = arith.mulf %0, %2 : vector<4x16xf32>
    %c0_3 = arith.constant 0 : index
    %c0_4 = arith.constant 0 : index
    %4 = vector.load %arg3[%c0_3, %c0_4] : memref<16x8xf32, #tpu.memory_space<vmem>>, vector<16x8xf32>
    %cst = arith.constant dense<0.000000e+00> : vector<4x8xf32>
    %5 = tpu.matmul %3, %4, %cst {dimension_numbers = #tpu.dot_dimension_numbers<[1], [0], [0], [1], [0, 0, 1, 1], [], []>} : vector<4x16xf32>, vector<16x8xf32>, vector<4x8xf32> -> vector<4x8xf32>
    %c0_5 = arith.constant 0 : index
    %c0_6 = arith.constant 0 : index
    %6 = vector.load %arg0[%c0_5, %c0_6] : memref<4x4xf32, #tpu.memory_space<vmem>>, vector<4x4xf32>
    %cst_7 = arith.constant dense<0.000000e+00> : vector<4x8xf32>
    %7 = tpu.matmul %6, %5, %cst_7 {dimension_numbers = #tpu.dot_dimension_numbers<[1], [0], [0], [1], [0, 0, 1, 1], [], []>} : vector<4x4xf32>, vector<4x8xf32>, vector<4x8xf32> -> vector<4x8xf32>
    %c0_8 = arith.constant 0 : index
    %c0_9 = arith.constant 0 : index
    %8 = vector.load %arg4[%c0_8, %c0_9] : memref<1x8xf32, #tpu.memory_space<vmem>>, vector<1x8xf32>
    %9 = vector.broadcast %8 : vector<1x8xf32> to vector<4x8xf32>
    %10 = arith.addf %7, %9 : vector<4x8xf32>
    %cst_10 = arith.constant 0.000000e+00 : f32
    %11 = vector.broadcast %cst_10 : f32 to vector<4x8xf32>
    %12 = arith.maximumf %10, %11 : vector<4x8xf32>
    %c0_11 = arith.constant 0 : index
    %c0_12 = arith.constant 0 : index
    %13 = vector.load %arg5[%c0_11, %c0_12] : memref<4x8xf32, #tpu.memory_space<vmem>>, vector<4x8xf32>
    tpu.vector_store %arg5[%c0_11, %c0_12], %12 {strides = array<i32>} : memref<4x8xf32, #tpu.memory_space<vmem>>, vector<4x8xf32>,
    return
  }
}

</mosaic_0001>

<llo_original>
// kernel: mul.2
$region0: #{mul.2}
  #allocation0 [shape = 's32[1]{0}', space=sflag, size = 0x4, scoped, tag = 'scoped memory for mul.2']
  %s0 = inlined_call_operand.vmem [shape: f32[56], index: 0, kind: input, shape index: {}]
  %s1 = inlined_call_operand.vmem [shape: f32[56], index: 1, kind: input, shape index: {}]
  %s2 = inlined_call_operand.vmem [shape: f32[56], index: 2, kind: output, shape index: {}]
  %v3 = vld [vmem:[%s0] sm:$0x1]
  %v4 = vld [vmem:[%s1] sm:$0x1]
  %5 = xla_tuple %v3, %v4
  %6 = xla_tuple %5
  %v7 = vmul.f32 %v3, %v4
  %8 = xla_tuple %v7
  %9 = vst [vmem:[%s2] sm:$0x1] %v7

// kernel: graph_encoder_forward.3
$region0: #{graph_encoder_forward.3}
  #allocation0 [shape = 'u32[]', space=smem, size = 0x4, offset = 0x4, fixed_abs, tag = 'smem constant byte address 0x4 - core index']
  #allocation1 [shape = 'u32[144,128]{1,0:T(1,128)}', space=vmem, size = 0x12000, scoped, tag = 'internal scratch']
  #allocation2 [shape = 'f32[1,1]{1,0:T(1,128)S(1)}', space=vmem, size = 0x200, scoped, tag = 'scoped memory for graph_encoder_forward.3']
  %s0 = inlined_call_operand.vmem [shape: f32[16,16], index: 0, kind: input, shape index: {}]
  %s1 = inlined_call_operand.vmem [shape: f32[16,16], index: 1, kind: input, shape index: {}]
  %s2 = inlined_call_operand.vmem [shape: f32[16,8], index: 2, kind: input, shape index: {}]
  %s3 = inlined_call_operand.vmem [shape: f32[8,16], index: 3, kind: input, shape index: {}]
  %s4 = inlined_call_operand.vmem [shape: f32[1,16], index: 4, kind: input, shape index: {}]
  %s5 = inlined_call_operand.vmem [shape: f32[16,2], index: 5, kind: input, shape index: {}]
  %s6 = inlined_call_operand.<no memory space> [shape: f32[1,1], index: 6, kind: input, shape index: {}]
  %s7 = inlined_call_operand.vmem [shape: f32[16,16], index: 7, kind: output, shape index: {0}]
  %s8 = inlined_call_operand.vmem [shape: f32[16,1], index: 8, kind: output, shape index: {1}]
  %9 = xla_tuple %s7, %s8
  %s10 = sld [smem:[#allocation0]]
  $region46: #{graph_encoder_forward.3} parent=0
    _
  %s12 = ssub.s32 1, %s10
  %s13 = scalar_select 0, %s12, %s10
  %v14 = vstv %s6
  %15 = vst [vmem:[#allocation2] sm:$0x1] %v14
  // Predicated region
  $region2: #{graph_encoder_forward.3} parent=0 // pred_check
    _
  $region3: #{graph_encoder_forward.3} parent=0 // pred_check_branch
    %17 = sbr.rel (0) target = $region5
  $region4: #{graph_encoder_forward.3} parent=0 // pred_region
    _
  $region5: #{graph_encoder_forward.3} parent=0 // pred_fallthru
    _
  // Predicated region
  $region6: #{graph_encoder_forward.3} parent=0 // pred_check
    _
  $region7: #{graph_encoder_forward.3} parent=0 // pred_check_branch
    %19 = sbr.rel (0) target = $region9
  $region8: #{graph_encoder_forward.3} parent=0 // pred_region
    _
  $region9: #{graph_encoder_forward.3} parent=0 // pred_fallthru
    _
  // Predicated region
  $region10: #{graph_encoder_forward.3} parent=0 // pred_check
    _
  $region11: #{graph_encoder_forward.3} parent=0 // pred_check_branch
    %21 = sbr.rel (0) target = $region13
  $region12: #{graph_encoder_forward.3} parent=0 // pred_region
    _
  $region13: #{graph_encoder_forward.3} parent=0 // pred_fallthru
    _
  // Predicated region
  $region14: #{graph_encoder_forward.3} parent=0 // pred_check
    _
  $region15: #{graph_encoder_forward.3} parent=0 // pred_check_branch
    %23 = sbr.rel (0) target = $region17
  $region16: #{graph_encoder_forward.3} parent=0 // pred_region
    _
  $region17: #{graph_encoder_forward.3} parent=0 // pred_fallthru
    _
  // Predicated region
  $region18: #{graph_encoder_forward.3} parent=0 // pred_check
    _
  $region19: #{graph_encoder_forward.3} parent=0 // pred_check_branch
    %25 = sbr.rel (0) target = $region21
  $region20: #{graph_encoder_forward.3} parent=0 // pred_region
    _
  $region21: #{graph_encoder_forward.3} parent=0 // pred_fallthru
    _
  // Predicated region
  $region22: #{graph_encoder_forward.3} parent=0 // pred_check
    _
  $region23: #{graph_encoder_forward.3} parent=0 // pred_check_branch
    %27 = sbr.rel (0) target = $region25
  $region24: #{graph_encoder_forward.3} parent=0 // pred_region
    _
  $region25: #{graph_encoder_forward.3} parent=0 // pred_fallthru
    _
  // Predicated region
  $region26: #{graph_encoder_forward.3} parent=0 // pred_check
    _
  $region27: #{graph_encoder_forward.3} parent=0 // pred_check_branch
    %29 = sbr.rel (0) target = $region29
  $region28: #{graph_encoder_forward.3} parent=0 // pred_region
    _
  $region29: #{graph_encoder_forward.3} parent=0 // pred_fallthru
    _
  %v30 = vld [vmem:[%s2] sm:$0xff]
  %v31 = vld [vmem:[%s2 + $0x8] sm:$0xff]
  %v32 = vld [vmem:[%s3] sm:$0xff]
  %vm33 = vcmask 64512
  %v35 = vsel %vm33, %v30, 0
  %v38 = vsel %vm33, %v31, 0
  %40 = vmatprep.subr.mxu0 0.0
  %41 = vmatpush1.msra.mxu0 %v32
  %42 = vmatprep.subr.mxu0 0.0
  %43 = vmatpush1.msra.mxu0 0.0
  %44 = vmatprep.subr.mxu0 0.0
  %45 = vmatpush1.msra.mxu0 0.0
  %46 = vmatprep.subr.mxu0 0.0
  %47 = vmatpush1.msra.mxu0 0.0
  %48 = vmatprep.subr.mxu0 0.0
  %49 = vmatpush1.msra.mxu0 0.0
  %50 = vmatprep.subr.mxu0 0.0
  %51 = vmatpush1.msra.mxu0 0.0
  %52 = vmatprep.subr.mxu0 0.0
  %53 = vmatpush1.msra.mxu0 0.0
  %54 = vmatprep.subr.mxu0 0.0
  %55 = vmatpush1.msra.mxu0 0.0
  %56 = vmatprep.subr.mxu0 0.0
  %57 = vmatpush1.msra.mxu0 0.0
  %58 = vmatprep.subr.mxu0 0.0
  %59 = vmatpush1.msra.mxu0 0.0
  %60 = vmatprep.subr.mxu0 0.0
  %61 = vmatpush1.msra.mxu0 0.0
  %62 = vmatprep.subr.mxu0 0.0
  %63 = vmatpush1.msra.mxu0 0.0
  %64 = vmatprep.subr.mxu0 0.0
  %65 = vmatpush1.msra.mxu0 0.0
  %66 = vmatprep.subr.mxu0 0.0
  %67 = vmatpush1.msra.mxu0 0.0
  %68 = vmatprep.subr.mxu0 0.0
  %69 = vmatpush1.msra.mxu0 0.0
  %70 = vmatprep.subr.mxu0 0.0
  %71 = vmatpush1.msra.mxu0 0.0
  %72 = vmatprep.subr.mxu0 0.0
  %73 = vmatpush1.msra.mxu0 0.0
  %74 = vmatprep.subr.mxu0 0.0
  %75 = vmatpush1.msra.mxu0 0.0
  %76 = vmatprep.subr.mxu0 0.0
  %77 = vmatpush1.msra.mxu0 0.0
  %78 = vmatprep.subr.mxu0 0.0
  %79 = vmatpush1.msra.mxu0 0.0
  %80 = vmatprep.subr.mxu0 0.0
  %81 = vmatpush1.msra.mxu0 0.0
  %82 = vmatprep.subr.mxu0 0.0
  %83 = vmatpush1.msra.mxu0 0.0
  %84 = vmatprep.subr.mxu0 0.0
  %85 = vmatpush1.msra.mxu0 0.0
  %86 = vmatprep.subr.mxu0 0.0
  %87 = vmatpush1.msra.mxu0 0.0
  %88 = vmatprep.subr.mxu0 0.0
  %89 = vmatpush1.msra.mxu0 0.0
  %90 = vmatprep.subr.mxu0 0.0
  %91 = vmatpush1.msra.mxu0 0.0
  %92 = vmatprep.subr.mxu0 0.0
  %93 = vmatpush1.msra.mxu0 0.0
  %94 = vmatprep.subr.mxu0 0.0
  %95 = vmatpush1.msra.mxu0 0.0
  %96 = vmatprep.subr.mxu0 0.0
  %97 = vmatpush1.msra.mxu0 0.0
  %98 = vmatprep.subr.mxu0 0.0
  %99 = vmatpush1.msra.mxu0 0.0
  %100 = vmatprep.subr.mxu0 0.0
  %101 = vmatpush1.msra.mxu0 0.0
  %102 = vmatprep.subr.mxu0 0.0
  %103 = vmatpush1.msra.mxu0 0.0
  %104 = vmatprep.mubr.f32.mxu0 0.0
  %105 = vmatmul.mubr.f32.gmra.mrb[0].mxu0 %v35
  %v106 = vpop.f32.mrb[0].mxu0
  %v107 = vadd.f32 0.0, %v106
  %v108 = vpop.f32.mrb[0].mxu0
  %109 = vmatprep.mubr.f32.mxu0 0.0
  %110 = vmatmul.mubr.f32.gmra.mrb[0].mxu0 %v38
  %v111 = vpop.f32.mrb[0].mxu0
  %v112 = vadd.f32 0.0, %v111
  %v113 = vpop.f32.mrb[0].mxu0
  %114 = vdwg.mxu0
  %v115 = vld [vmem:[%s0] sm:$0xff]
  %v116 = vld [vmem:[%s0 + $0x8] sm:$0xff]
  %v117 = vld [vmem:[%s4] sm:$0x1]
  %v119 = vlaneseq
  %v120 = vshrl.u32 %v119, 7
  %v121 = vsub.s32 0, %v120
  %v122 = vrot.slane %v117, %v121
  %vm124 = vcmask 130048
  %v126 = vsel %vm124, %v115, 0
  %v129 = vsel %vm124, %v116, 0
  %131 = vmatprep.subr.mxu0 0.0
  %132 = vmatpush1.msra.mxu0 %v107
  %133 = vmatprep.subr.mxu0 0.0
  %134 = vmatpush1.msra.mxu0 %v112
  %135 = vmatprep.subr.mxu0 0.0
  %136 = vmatpush1.msra.mxu0 0.0
  %137 = vmatprep.subr.mxu0 0.0
  %138 = vmatpush1.msra.mxu0 0.0
  %139 = vmatprep.subr.mxu0 0.0
  %140 = vmatpush1.msra.mxu0 0.0
  %141 = vmatprep.subr.mxu0 0.0
  %142 = vmatpush1.msra.mxu0 0.0
  %143 = vmatprep.subr.mxu0 0.0
  %144 = vmatpush1.msra.mxu0 0.0
  %145 = vmatprep.subr.mxu0 0.0
  %146 = vmatpush1.msra.mxu0 0.0
  %147 = vmatprep.subr.mxu0 0.0
  %148 = vmatpush1.msra.mxu0 0.0
  %149 = vmatprep.subr.mxu0 0.0
  %150 = vmatpush1.msra.mxu0 0.0
  %151 = vmatprep.subr.mxu0 0.0
  %152 = vmatpush1.msra.mxu0 0.0
  %153 = vmatprep.subr.mxu0 0.0
  %154 = vmatpush1.msra.mxu0 0.0
  %155 = vmatprep.subr.mxu0 0.0
  %156 = vmatpush1.msra.mxu0 0.0
  %157 = vmatprep.subr.mxu0 0.0
  %158 = vmatpush1.msra.mxu0 0.0
  %159 = vmatprep.subr.mxu0 0.0
  %160 = vmatpush1.msra.mxu0 0.0
  %161 = vmatprep.subr.mxu0 0.0
  %162 = vmatpush1.msra.mxu0 0.0
  %163 = vmatprep.subr.mxu0 0.0
  %164 = vmatpush1.msra.mxu0 0.0
  %165 = vmatprep.subr.mxu0 0.0
  %166 = vmatpush1.msra.mxu0 0.0
  %167 = vmatprep.subr.mxu0 0.0
  %168 = vmatpush1.msra.mxu0 0.0
  %169 = vmatprep.subr.mxu0 0.0
  %170 = vmatpush1.msra.mxu0 0.0
  %171 = vmatprep.subr.mxu0 0.0
  %172 = vmatpush1.msra.mxu0 0.0
  %173 = vmatprep.subr.mxu0 0.0
  %174 = vmatpush1.msra.mxu0 0.0
  %175 = vmatprep.subr.mxu0 0.0
  %176 = vmatpush1.msra.mxu0 0.0
  %177 = vmatprep.subr.mxu0 0.0
  %178 = vmatpush1.msra.mxu0 0.0
  %179 = vmatprep.subr.mxu0 0.0
  %180 = vmatpush1.msra.mxu0 0.0
  %181 = vmatprep.subr.mxu0 0.0
  %182 = vmatpush1.msra.mxu0 0.0
  %183 = vmatprep.subr.mxu0 0.0
  %184 = vmatpush1.msra.mxu0 0.0
  %185 = vmatprep.subr.mxu0 0.0
  %186 = vmatpush1.msra.mxu0 0.0
  %187 = vmatprep.subr.mxu0 0.0
  %188 = vmatpush1.msra.mxu0 0.0
  %189 = vmatprep.subr.mxu0 0.0
  %190 = vmatpush1.msra.mxu0 0.0
  %191 = vmatprep.subr.mxu0 0.0
  %192 = vmatpush1.msra.mxu0 0.0
  %193 = vmatprep.subr.mxu0 0.0
  %194 = vmatpush1.msra.mxu0 0.0
  %195 = vmatprep.mubr.f32.mxu0 0.0
  %196 = vmatmul.mubr.f32.gmra.mrb[0].mxu0 %v126
  %v197 = vpop.f32.mrb[0].mxu0
  %v198 = vadd.f32 %v122, %v197
  %v199 = vpop.f32.mrb[0].mxu0
  %200 = vmatprep.mubr.f32.mxu0 0.0
  %201 = vmatmul.mubr.f32.gmra.mrb[0].mxu0 %v129
  %v202 = vpop.f32.mrb[0].mxu0
  %v203 = vadd.f32 %v122, %v202
  %v204 = vpop.f32.mrb[0].mxu0
  %205 = vdwg.mxu0
  %v206 = vmax.f32 %v198, 0.0
  %v207 = vmax.f32 %v203, 0.0
  %208 = vst.msk [vmem:[%s7] sm:$0xff] %vm124, %v206
  %209 = vst.msk [vmem:[%s7 + $0x8] sm:$0xff] %vm124, %v207
  %v210 = vld [vmem:[%s5] sm:$0xff]
  %v211 = vld [vmem:[%s5 + $0x8] sm:$0xff]
  %v213 = vsel %vm124, %v206, 0
  %v216 = vsel %vm124, %v207, 0
  %218 = vmatprep.subr.mxu0 0.0
  %219 = vmatpush1.msra.mxu0 %v210
  %220 = vmatprep.subr.mxu0 0.0
  %221 = vmatpush1.msra.mxu0 %v211
  %222 = vmatprep.subr.mxu0 0.0
  %223 = vmatpush1.msra.mxu0 0.0
  %224 = vmatprep.subr.mxu0 0.0
  %225 = vmatpush1.msra.mxu0 0.0
  %226 = vmatprep.subr.mxu0 0.0
  %227 = vmatpush1.msra.mxu0 0.0
  %228 = vmatprep.subr.mxu0 0.0
  %229 = vmatpush1.msra.mxu0 0.0
  %230 = vmatprep.subr.mxu0 0.0
  %231 = vmatpush1.msra.mxu0 0.0
  %232 = vmatprep.subr.mxu0 0.0
  %233 = vmatpush1.msra.mxu0 0.0
  %234 = vmatprep.subr.mxu0 0.0
  %235 = vmatpush1.msra.mxu0 0.0
  %236 = vmatprep.subr.mxu0 0.0
  %237 = vmatpush1.msra.mxu0 0.0
  %238 = vmatprep.subr.mxu0 0.0
  %239 = vmatpush1.msra.mxu0 0.0
  %240 = vmatprep.subr.mxu0 0.0
  %241 = vmatpush1.msra.mxu0 0.0
  %242 = vmatprep.subr.mxu0 0.0
  %243 = vmatpush1.msra.mxu0 0.0
  %244 = vmatprep.subr.mxu0 0.0
  %245 = vmatpush1.msra.mxu0 0.0
  %246 = vmatprep.subr.mxu0 0.0
  %247 = vmatpush1.msra.mxu0 0.0
  %248 = vmatprep.subr.mxu0 0.0
  %249 = vmatpush1.msra.mxu0 0.0
  %250 = vmatprep.subr.mxu0 0.0
  %251 = vmatpush1.msra.mxu0 0.0
  %252 = vmatprep.subr.mxu0 0.0
  %253 = vmatpush1.msra.mxu0 0.0
  %254 = vmatprep.subr.mxu0 0.0
  %255 = vmatpush1.msra.mxu0 0.0
  %256 = vmatprep.subr.mxu0 0.0
  %257 = vmatpush1.msra.mxu0 0.0
  %258 = vmatprep.subr.mxu0 0.0
  %259 = vmatpush1.msra.mxu0 0.0
  %260 = vmatprep.subr.mxu0 0.0
  %261 = vmatpush1.msra.mxu0 0.0
  %262 = vmatprep.subr.mxu0 0.0
  %263 = vmatpush1.msra.mxu0 0.0
  %264 = vmatprep.subr.mxu0 0.0
  %265 = vmatpush1.msra.mxu0 0.0
  %266 = vmatprep.subr.mxu0 0.0
  %267 = vmatpush1.msra.mxu0 0.0
  %268 = vmatprep.subr.mxu0 0.0
  %269 = vmatpush1.msra.mxu0 0.0
  %270 = vmatprep.subr.mxu0 0.0
  %271 = vmatpush1.msra.mxu0 0.0
  %272 = vmatprep.subr.mxu0 0.0
  %273 = vmatpush1.msra.mxu0 0.0
  %274 = vmatprep.subr.mxu0 0.0
  %275 = vmatpush1.msra.mxu0 0.0
  %276 = vmatprep.subr.mxu0 0.0
  %277 = vmatpush1.msra.mxu0 0.0
  %278 = vmatprep.subr.mxu0 0.0
  %279 = vmatpush1.msra.mxu0 0.0
  %280 = vmatprep.subr.mxu0 0.0
  %281 = vmatpush1.msra.mxu0 0.0
  %282 = vmatprep.mubr.f32.mxu0 0.0
  %283 = vmatmul.mubr.f32.gmra.mrb[0].mxu0 %v213
  %v284 = vpop.f32.mrb[0].mxu0
  %v285 = vadd.f32 0.0, %v284
  %v286 = vpop.f32.mrb[0].mxu0
  %287 = vmatprep.mubr.f32.mxu0 0.0
  %288 = vmatmul.mubr.f32.gmra.mrb[0].mxu0 %v216
  %v289 = vpop.f32.mrb[0].mxu0
  %v290 = vadd.f32 0.0, %v289
  %v291 = vpop.f32.mrb[0].mxu0
  %292 = vdwg.mxu0
  %v293 = vld [vmem:[%s1] sm:$0xff]
  %v294 = vld [vmem:[%s1 + $0x8] sm:$0xff]
  %v295 = vld [vmem:[#allocation2] sm:$0x1]
  %v297 = vlaneseq
  %v298 = vshrl.u32 %v297, 7
  %v299 = vsub.s32 0, %v298
  %v300 = vrot.slane %v295, %v299
  %v303 = vsel %vm124, %v293, 0
  %v306 = vsel %vm124, %v294, 0
  %308 = vmatprep.subr.mxu0 0.0
  %309 = vmatpush1.msra.mxu0 %v285
  %310 = vmatprep.subr.mxu0 0.0
  %311 = vmatpush1.msra.mxu0 %v290
  %312 = vmatprep.subr.mxu0 0.0
  %313 = vmatpush1.msra.mxu0 0.0
  %314 = vmatprep.subr.mxu0 0.0
  %315 = vmatpush1.msra.mxu0 0.0
  %316 = vmatprep.subr.mxu0 0.0
  %317 = vmatpush1.msra.mxu0 0.0
  %318 = vmatprep.subr.mxu0 0.0
  %319 = vmatpush1.msra.mxu0 0.0
  %320 = vmatprep.subr.mxu0 0.0
  %321 = vmatpush1.msra.mxu0 0.0
  %322 = vmatprep.subr.mxu0 0.0
  %323 = vmatpush1.msra.mxu0 0.0
  %324 = vmatprep.subr.mxu0 0.0
  %325 = vmatpush1.msra.mxu0 0.0
  %326 = vmatprep.subr.mxu0 0.0
  %327 = vmatpush1.msra.mxu0 0.0
  %328 = vmatprep.subr.mxu0 0.0
  %329 = vmatpush1.msra.mxu0 0.0
  %330 = vmatprep.subr.mxu0 0.0
  %331 = vmatpush1.msra.mxu0 0.0
  %332 = vmatprep.subr.mxu0 0.0
  %333 = vmatpush1.msra.mxu0 0.0
  %334 = vmatprep.subr.mxu0 0.0
  %335 = vmatpush1.msra.mxu0 0.0
  %336 = vmatprep.subr.mxu0 0.0
  %337 = vmatpush1.msra.mxu0 0.0
  %338 = vmatprep.subr.mxu0 0.0
  %339 = vmatpush1.msra.mxu0 0.0
  %340 = vmatprep.subr.mxu0 0.0
  %341 = vmatpush1.msra.mxu0 0.0
  %342 = vmatprep.subr.mxu0 0.0
  %343 = vmatpush1.msra.mxu0 0.0
  %344 = vmatprep.subr.mxu0 0.0
  %345 = vmatpush1.msra.mxu0 0.0
  %346 = vmatprep.subr.mxu0 0.0
  %347 = vmatpush1.msra.mxu0 0.0
  %348 = vmatprep.subr.mxu0 0.0
  %349 = vmatpush1.msra.mxu0 0.0
  %350 = vmatprep.subr.mxu0 0.0
  %351 = vmatpush1.msra.mxu0 0.0
  %352 = vmatprep.subr.mxu0 0.0
  %353 = vmatpush1.msra.mxu0 0.0
  %354 = vmatprep.subr.mxu0 0.0
  %355 = vmatpush1.msra.mxu0 0.0
  %356 = vmatprep.subr.mxu0 0.0
  %357 = vmatpush1.msra.mxu0 0.0
  %358 = vmatprep.subr.mxu0 0.0
  %359 = vmatpush1.msra.mxu0 0.0
  %360 = vmatprep.subr.mxu0 0.0
  %361 = vmatpush1.msra.mxu0 0.0
  %362 = vmatprep.subr.mxu0 0.0
  %363 = vmatpush1.msra.mxu0 0.0
  %364 = vmatprep.subr.mxu0 0.0
  %365 = vmatpush1.msra.mxu0 0.0
  %366 = vmatprep.subr.mxu0 0.0
  %367 = vmatpush1.msra.mxu0 0.0
  %368 = vmatprep.subr.mxu0 0.0
  %369 = vmatpush1.msra.mxu0 0.0
  %370 = vmatprep.subr.mxu0 0.0
  %371 = vmatpush1.msra.mxu0 0.0
  %372 = vmatprep.mubr.f32.mxu0 0.0
  %373 = vmatmul.mubr.f32.gmra.mrb[0].mxu0 %v303
  %v374 = vpop.f32.mrb[0].mxu0
  %v375 = vadd.f32 %v300, %v374
  %v376 = vpop.f32.mrb[0].mxu0
  %377 = vmatprep.mubr.f32.mxu0 0.0
  %378 = vmatmul.mubr.f32.gmra.mrb[0].mxu0 %v306
  %v379 = vpop.f32.mrb[0].mxu0
  %v380 = vadd.f32 %v300, %v379
  %v381 = vpop.f32.mrb[0].mxu0
  %382 = vdwg.mxu0
  %385 = vrot.lane.b32.xlu0 %v285, 127
  %v386 = vpop.permute.xlu0 %385
  %387 = vrot.lane.b32.xlu0 %v290, 127
  %v388 = vpop.permute.xlu0 %387
  %v391 = vadd.f32 %v375, %v386
  %v392 = vadd.f32 %v380, %v388
  %v393 = vtanh.pop %v391
  %v394 = vtanh.pop %v392
  %vm395 = vcmask 7168
  %396 = vst.msk [vmem:[%s8] sm:$0xff] %vm395, %v393
  %397 = vst.msk [vmem:[%s8 + $0x8] sm:$0xff] %vm395, %v394
  // Predicated region
  $region30: #{graph_encoder_forward.3} parent=0 // pred_check
    _
  $region31: #{graph_encoder_forward.3} parent=0 // pred_check_branch
    %399 = sbr.rel (0) target = $region33
  $region32: #{graph_encoder_forward.3} parent=0 // pred_region
    _
  $region33: #{graph_encoder_forward.3} parent=0 // pred_fallthru
    _
  // Predicated region
  $region34: #{graph_encoder_forward.3} parent=0 // pred_check
    _
  $region35: #{graph_encoder_forward.3} parent=0 // pred_check_branch
    %401 = sbr.rel (0) target = $region37
  $region36: #{graph_encoder_forward.3} parent=0 // pred_region
    _
  $region37: #{graph_encoder_forward.3} parent=0 // pred_fallthru
    _
  // Predicated region
  $region38: #{graph_encoder_forward.3} parent=0 // pred_check
    _
  $region39: #{graph_encoder_forward.3} parent=0 // pred_check_branch
    %403 = sbr.rel (0) target = $region41
  $region40: #{graph_encoder_forward.3} parent=0 // pred_region
    _
  $region41: #{graph_encoder_forward.3} parent=0 // pred_fallthru
    _
  // Predicated region
  $region42: #{graph_encoder_forward.3} parent=0 // pred_check
    _
  $region43: #{graph_encoder_forward.3} parent=0 // pred_check_branch
    %405 = sbr.rel (0) target = $region45
  $region44: #{graph_encoder_forward.3} parent=0 // pred_region
    _
  $region45: #{graph_encoder_forward.3} parent=0 // pred_fallthru
    _

// kernel: graph_encoder_forward.4
$region0: #{graph_encoder_forward.4}
  #allocation0 [shape = 'u32[]', space=smem, size = 0x4, offset = 0x4, fixed_abs, tag = 'smem constant byte address 0x4 - core index']
  #allocation1 [shape = 'u32[144,128]{1,0:T(1,128)}', space=vmem, size = 0x12000, scoped, tag = 'internal scratch']
  #allocation2 [shape = 'f32[1,1]{1,0:T(1,128)S(1)}', space=vmem, size = 0x200, scoped, tag = 'scoped memory for graph_encoder_forward.4']
  %s0 = inlined_call_operand.vmem [shape: f32[8,8], index: 0, kind: input, shape index: {}]
  %s1 = inlined_call_operand.vmem [shape: f32[8,16], index: 1, kind: input, shape index: {}]
  %s2 = inlined_call_operand.vmem [shape: f32[8,1], index: 2, kind: input, shape index: {}]
  %s3 = inlined_call_operand.vmem [shape: f32[16,2], index: 3, kind: input, shape index: {}]
  %s4 = inlined_call_operand.<no memory space> [shape: f32[1,1], index: 4, kind: input, shape index: {}]
  %s5 = inlined_call_operand.vmem [shape: f32[8,16], index: 5, kind: output, shape index: {0}]
  %s6 = inlined_call_operand.vmem [shape: f32[8,1], index: 6, kind: output, shape index: {1}]
  %7 = xla_tuple %s5, %s6
  %s8 = sld [smem:[#allocation0]]
  $region38: #{graph_encoder_forward.4} parent=0
    _
  %s10 = ssub.s32 1, %s8
  %s11 = scalar_select 0, %s10, %s8
  %v12 = vstv %s4
  %13 = vst [vmem:[#allocation2] sm:$0x1] %v12
  // Predicated region
  $region2: #{graph_encoder_forward.4} parent=0 // pred_check
    _
  $region3: #{graph_encoder_forward.4} parent=0 // pred_check_branch
    %15 = sbr.rel (0) target = $region5
  $region4: #{graph_encoder_forward.4} parent=0 // pred_region
    _
  $region5: #{graph_encoder_forward.4} parent=0 // pred_fallthru
    _
  // Predicated region
  $region6: #{graph_encoder_forward.4} parent=0 // pred_check
    _
  $region7: #{graph_encoder_forward.4} parent=0 // pred_check_branch
    %17 = sbr.rel (0) target = $region9
  $region8: #{graph_encoder_forward.4} parent=0 // pred_region
    _
  $region9: #{graph_encoder_forward.4} parent=0 // pred_fallthru
    _
  // Predicated region
  $region10: #{graph_encoder_forward.4} parent=0 // pred_check
    _
  $region11: #{graph_encoder_forward.4} parent=0 // pred_check_branch
    %19 = sbr.rel (0) target = $region13
  $region12: #{graph_encoder_forward.4} parent=0 // pred_region
    _
  $region13: #{graph_encoder_forward.4} parent=0 // pred_fallthru
    _
  // Predicated region
  $region14: #{graph_encoder_forward.4} parent=0 // pred_check
    _
  $region15: #{graph_encoder_forward.4} parent=0 // pred_check_branch
    %21 = sbr.rel (0) target = $region17
  $region16: #{graph_encoder_forward.4} parent=0 // pred_region
    _
  $region17: #{graph_encoder_forward.4} parent=0 // pred_fallthru
    _
  // Predicated region
  $region18: #{graph_encoder_forward.4} parent=0 // pred_check
    _
  $region19: #{graph_encoder_forward.4} parent=0 // pred_check_branch
    %23 = sbr.rel (0) target = $region21
  $region20: #{graph_encoder_forward.4} parent=0 // pred_region
    _
  $region21: #{graph_encoder_forward.4} parent=0 // pred_fallthru
    _
  %v24 = vld [vmem:[%s1] sm:$0xff]
  %v25 = vld [vmem:[%s2] sm:$0xff]
  %27 = vset.pattern.permute.xlu0 0
  %28 = vperm.xlu0 %27, %v25
  %v29 = vpop.permute.xlu0 %28
  %v31 = vmul.f32 %v24, %v29
  %vm32 = vcmask 130048
  %33 = vst.msk [vmem:[%s5] sm:$0xff] %vm32, %v31
  %v34 = vld [vmem:[%s3] sm:$0xff]
  %v35 = vld [vmem:[%s3 + $0x8] sm:$0xff]
  %v37 = vsel %vm32, %v31, 0
  %39 = vmatprep.subr.mxu0 0.0
  %40 = vmatpush1.msra.mxu0 %v34
  %41 = vmatprep.subr.mxu0 0.0
  %42 = vmatpush1.msra.mxu0 %v35
  %43 = vmatprep.subr.mxu0 0.0
  %44 = vmatpush1.msra.mxu0 0.0
  %45 = vmatprep.subr.mxu0 0.0
  %46 = vmatpush1.msra.mxu0 0.0
  %47 = vmatprep.subr.mxu0 0.0
  %48 = vmatpush1.msra.mxu0 0.0
  %49 = vmatprep.subr.mxu0 0.0
  %50 = vmatpush1.msra.mxu0 0.0
  %51 = vmatprep.subr.mxu0 0.0
  %52 = vmatpush1.msra.mxu0 0.0
  %53 = vmatprep.subr.mxu0 0.0
  %54 = vmatpush1.msra.mxu0 0.0
  %55 = vmatprep.subr.mxu0 0.0
  %56 = vmatpush1.msra.mxu0 0.0
  %57 = vmatprep.subr.mxu0 0.0
  %58 = vmatpush1.msra.mxu0 0.0
  %59 = vmatprep.subr.mxu0 0.0
  %60 = vmatpush1.msra.mxu0 0.0
  %61 = vmatprep.subr.mxu0 0.0
  %62 = vmatpush1.msra.mxu0 0.0
  %63 = vmatprep.subr.mxu0 0.0
  %64 = vmatpush1.msra.mxu0 0.0
  %65 = vmatprep.subr.mxu0 0.0
  %66 = vmatpush1.msra.mxu0 0.0
  %67 = vmatprep.subr.mxu0 0.0
  %68 = vmatpush1.msra.mxu0 0.0
  %69 = vmatprep.subr.mxu0 0.0
  %70 = vmatpush1.msra.mxu0 0.0
  %71 = vmatprep.subr.mxu0 0.0
  %72 = vmatpush1.msra.mxu0 0.0
  %73 = vmatprep.subr.mxu0 0.0
  %74 = vmatpush1.msra.mxu0 0.0
  %75 = vmatprep.subr.mxu0 0.0
  %76 = vmatpush1.msra.mxu0 0.0
  %77 = vmatprep.subr.mxu0 0.0
  %78 = vmatpush1.msra.mxu0 0.0
  %79 = vmatprep.subr.mxu0 0.0
  %80 = vmatpush1.msra.mxu0 0.0
  %81 = vmatprep.subr.mxu0 0.0
  %82 = vmatpush1.msra.mxu0 0.0
  %83 = vmatprep.subr.mxu0 0.0
  %84 = vmatpush1.msra.mxu0 0.0
  %85 = vmatprep.subr.mxu0 0.0
  %86 = vmatpush1.msra.mxu0 0.0
  %87 = vmatprep.subr.mxu0 0.0
  %88 = vmatpush1.msra.mxu0 0.0
  %89 = vmatprep.subr.mxu0 0.0
  %90 = vmatpush1.msra.mxu0 0.0
  %91 = vmatprep.subr.mxu0 0.0
  %92 = vmatpush1.msra.mxu0 0.0
  %93 = vmatprep.subr.mxu0 0.0
  %94 = vmatpush1.msra.mxu0 0.0
  %95 = vmatprep.subr.mxu0 0.0
  %96 = vmatpush1.msra.mxu0 0.0
  %97 = vmatprep.subr.mxu0 0.0
  %98 = vmatpush1.msra.mxu0 0.0
  %99 = vmatprep.subr.mxu0 0.0
  %100 = vmatpush1.msra.mxu0 0.0
  %101 = vmatprep.subr.mxu0 0.0
  %102 = vmatpush1.msra.mxu0 0.0
  %103 = vmatprep.mubr.f32.mxu0 0.0
  %104 = vmatmul.mubr.f32.gmra.mrb[0].mxu0 %v37
  %v105 = vpop.f32.mrb[0].mxu0
  %v106 = vadd.f32 0.0, %v105
  %v107 = vpop.f32.mrb[0].mxu0
  %108 = vdwg.mxu0
  %v109 = vld [vmem:[%s0] sm:$0xff]
  %v110 = vld [vmem:[#allocation2] sm:$0x1]
  %v112 = vlaneseq
  %v113 = vshrl.u32 %v112, 7
  %v114 = vsub.s32 0, %v113
  %v115 = vrot.slane %v110, %v114
  %vm117 = vcmask 64512
  %v119 = vsel %vm117, %v109, 0
  %121 = vmatprep.subr.mxu0 0.0
  %122 = vmatpush1.msra.mxu0 %v106
  %123 = vmatprep.subr.mxu0 0.0
  %124 = vmatpush1.msra.mxu0 0.0
  %125 = vmatprep.subr.mxu0 0.0
  %126 = vmatpush1.msra.mxu0 0.0
  %127 = vmatprep.subr.mxu0 0.0
  %128 = vmatpush1.msra.mxu0 0.0
  %129 = vmatprep.subr.mxu0 0.0
  %130 = vmatpush1.msra.mxu0 0.0
  %131 = vmatprep.subr.mxu0 0.0
  %132 = vmatpush1.msra.mxu0 0.0
  %133 = vmatprep.subr.mxu0 0.0
  %134 = vmatpush1.msra.mxu0 0.0
  %135 = vmatprep.subr.mxu0 0.0
  %136 = vmatpush1.msra.mxu0 0.0
  %137 = vmatprep.subr.mxu0 0.0
  %138 = vmatpush1.msra.mxu0 0.0
  %139 = vmatprep.subr.mxu0 0.0
  %140 = vmatpush1.msra.mxu0 0.0
  %141 = vmatprep.subr.mxu0 0.0
  %142 = vmatpush1.msra.mxu0 0.0
  %143 = vmatprep.subr.mxu0 0.0
  %144 = vmatpush1.msra.mxu0 0.0
  %145 = vmatprep.subr.mxu0 0.0
  %146 = vmatpush1.msra.mxu0 0.0
  %147 = vmatprep.subr.mxu0 0.0
  %148 = vmatpush1.msra.mxu0 0.0
  %149 = vmatprep.subr.mxu0 0.0
  %150 = vmatpush1.msra.mxu0 0.0
  %151 = vmatprep.subr.mxu0 0.0
  %152 = vmatpush1.msra.mxu0 0.0
  %153 = vmatprep.subr.mxu0 0.0
  %154 = vmatpush1.msra.mxu0 0.0
  %155 = vmatprep.subr.mxu0 0.0
  %156 = vmatpush1.msra.mxu0 0.0
  %157 = vmatprep.subr.mxu0 0.0
  %158 = vmatpush1.msra.mxu0 0.0
  %159 = vmatprep.subr.mxu0 0.0
  %160 = vmatpush1.msra.mxu0 0.0
  %161 = vmatprep.subr.mxu0 0.0
  %162 = vmatpush1.msra.mxu0 0.0
  %163 = vmatprep.subr.mxu0 0.0
  %164 = vmatpush1.msra.mxu0 0.0
  %165 = vmatprep.subr.mxu0 0.0
  %166 = vmatpush1.msra.mxu0 0.0
  %167 = vmatprep.subr.mxu0 0.0
  %168 = vmatpush1.msra.mxu0 0.0
  %169 = vmatprep.subr.mxu0 0.0
  %170 = vmatpush1.msra.mxu0 0.0
  %171 = vmatprep.subr.mxu0 0.0
  %172 = vmatpush1.msra.mxu0 0.0
  %173 = vmatprep.subr.mxu0 0.0
  %174 = vmatpush1.msra.mxu0 0.0
  %175 = vmatprep.subr.mxu0 0.0
  %176 = vmatpush1.msra.mxu0 0.0
  %177 = vmatprep.subr.mxu0 0.0
  %178 = vmatpush1.msra.mxu0 0.0
  %179 = vmatprep.subr.mxu0 0.0
  %180 = vmatpush1.msra.mxu0 0.0
  %181 = vmatprep.subr.mxu0 0.0
  %182 = vmatpush1.msra.mxu0 0.0
  %183 = vmatprep.subr.mxu0 0.0
  %184 = vmatpush1.msra.mxu0 0.0
  %185 = vmatprep.mubr.f32.mxu0 0.0
  %186 = vmatmul.mubr.f32.gmra.mrb[0].mxu0 %v119
  %v187 = vpop.f32.mrb[0].mxu0
  %v188 = vadd.f32 %v115, %v187
  %v189 = vpop.f32.mrb[0].mxu0
  %190 = vdwg.mxu0
  %192 = vrot.lane.b32.xlu0 %v106, 127
  %v193 = vpop.permute.xlu0 %192
  %v195 = vadd.f32 %v188, %v193
  %v196 = vtanh.pop %v195
  %vm197 = vcmask 7168
  %198 = vst.msk [vmem:[%s6] sm:$0xff] %vm197, %v196
  // Predicated region
  $region22: #{graph_encoder_forward.4} parent=0 // pred_check
    _
  $region23: #{graph_encoder_forward.4} parent=0 // pred_check_branch
    %200 = sbr.rel (0) target = $region25
  $region24: #{graph_encoder_forward.4} parent=0 // pred_region
    _
  $region25: #{graph_encoder_forward.4} parent=0 // pred_fallthru
    _
  // Predicated region
  $region26: #{graph_encoder_forward.4} parent=0 // pred_check
    _
  $region27: #{graph_encoder_forward.4} parent=0 // pred_check_branch
    %202 = sbr.rel (0) target = $region29
  $region28: #{graph_encoder_forward.4} parent=0 // pred_region
    _
  $region29: #{graph_encoder_forward.4} parent=0 // pred_fallthru
    _
  // Predicated region
  $region30: #{graph_encoder_forward.4} parent=0 // pred_check
    _
  $region31: #{graph_encoder_forward.4} parent=0 // pred_check_branch
    %204 = sbr.rel (0) target = $region33
  $region32: #{graph_encoder_forward.4} parent=0 // pred_region
    _
  $region33: #{graph_encoder_forward.4} parent=0 // pred_fallthru
    _
  // Predicated region
  $region34: #{graph_encoder_forward.4} parent=0 // pred_check
    _
  $region35: #{graph_encoder_forward.4} parent=0 // pred_check_branch
    %206 = sbr.rel (0) target = $region37
  $region36: #{graph_encoder_forward.4} parent=0 // pred_region
    _
  $region37: #{graph_encoder_forward.4} parent=0 // pred_fallthru
    _

// kernel: mul.3
$region0: #{mul.3}
  #allocation0 [shape = 's32[1]{0}', space=sflag, size = 0x4, scoped, tag = 'scoped memory for mul.3']
  %s0 = inlined_call_operand.vmem [shape: f32[12], index: 0, kind: input, shape index: {}]
  %s1 = inlined_call_operand.vmem [shape: f32[12], index: 1, kind: input, shape index: {}]
  %s2 = inlined_call_operand.vmem [shape: f32[12], index: 2, kind: output, shape index: {}]
  %v3 = vld [vmem:[%s0] sm:$0x1]
  %v4 = vld [vmem:[%s1] sm:$0x1]
  %5 = xla_tuple %v3, %v4
  %6 = xla_tuple %5
  %v7 = vmul.f32 %v3, %v4
  %8 = xla_tuple %v7
  %9 = vst [vmem:[%s2] sm:$0x1] %v7

// kernel: graph_encoder_forward.5
$region0: #{graph_encoder_forward.5}
  #allocation0 [shape = 'u32[]', space=smem, size = 0x4, offset = 0x4, fixed_abs, tag = 'smem constant byte address 0x4 - core index']
  #allocation1 [shape = 'u32[144,128]{1,0:T(1,128)}', space=vmem, size = 0x12000, scoped, tag = 'internal scratch']
  %s0 = inlined_call_operand.vmem [shape: f32[4,4], index: 0, kind: input, shape index: {}]
  %s1 = inlined_call_operand.vmem [shape: f32[4,16], index: 1, kind: input, shape index: {}]
  %s2 = inlined_call_operand.vmem [shape: f32[4,1], index: 2, kind: input, shape index: {}]
  %s3 = inlined_call_operand.vmem [shape: f32[16,8], index: 3, kind: input, shape index: {}]
  %s4 = inlined_call_operand.vmem [shape: f32[1,8], index: 4, kind: input, shape index: {}]
  %s5 = inlined_call_operand.hbm [shape: f32[4,8], index: 5, kind: output, shape index: {}]
  %s6 = sld [smem:[#allocation0]]
  $region30: #{graph_encoder_forward.5} parent=0
    _
  %s8 = ssub.s32 1, %s6
  %s9 = scalar_select 0, %s8, %s6
  $region1: #{graph_encoder_forward.5} parent=0
    #allocation2 [shape = 'u8[2048]{0}', space=vmem, size = 0x800, scoped, tag = 'output window, operand 0, single buffered']
    #allocation3 [shape = 's32[1]{0}', space=sflag, size = 0x4, scoped, tag = 'scoped memory for graph_encoder_forward.5']
    %10 = vsyncpa [#allocation3], 0
    // Predicated region
    $region2: #{graph_encoder_forward.5} parent=1 // pred_check
      _
    $region3: #{graph_encoder_forward.5} parent=1 // pred_check_branch
      %12 = sbr.rel (0) target = $region5
    $region4: #{graph_encoder_forward.5} parent=1 // pred_region
      _
    $region5: #{graph_encoder_forward.5} parent=1 // pred_fallthru
      _
    // Predicated region
    $region6: #{graph_encoder_forward.5} parent=1 // pred_check
      _
    $region7: #{graph_encoder_forward.5} parent=1 // pred_check_branch
      %14 = sbr.rel (0) target = $region9
    $region8: #{graph_encoder_forward.5} parent=1 // pred_region
      _
    $region9: #{graph_encoder_forward.5} parent=1 // pred_fallthru
      _
    // Predicated region
    $region10: #{graph_encoder_forward.5} parent=1 // pred_check
      _
    $region11: #{graph_encoder_forward.5} parent=1 // pred_check_branch
      %16 = sbr.rel (0) target = $region13
    $region12: #{graph_encoder_forward.5} parent=1 // pred_region
      _
    $region13: #{graph_encoder_forward.5} parent=1 // pred_fallthru
      _
    // Predicated region
    $region14: #{graph_encoder_forward.5} parent=1 // pred_check
      _
    $region15: #{graph_encoder_forward.5} parent=1 // pred_check_branch
      %18 = sbr.rel (0) target = $region17
    $region16: #{graph_encoder_forward.5} parent=1 // pred_region
      _
    $region17: #{graph_encoder_forward.5} parent=1 // pred_fallthru
      _
    // Predicated region
    $region18: #{graph_encoder_forward.5} parent=1 // pred_check
      _
    $region19: #{graph_encoder_forward.5} parent=1 // pred_check_branch
      %20 = sbr.rel (0) target = $region21
    $region20: #{graph_encoder_forward.5} parent=1 // pred_region
      _
    $region21: #{graph_encoder_forward.5} parent=1 // pred_fallthru
      _
    %v21 = vld [vmem:[%s1] sm:$0xf]
    %v22 = vld [vmem:[%s2] sm:$0xf]
    %24 = vset.pattern.permute.xlu0 0
    %25 = vperm.xlu0 %24, %v22
    %v26 = vpop.permute.xlu0 %25
    %v28 = vmul.f32 %v21, %v26
    %v29 = vld [vmem:[%s3] sm:$0xff]
    %v30 = vld [vmem:[%s3 + $0x8] sm:$0xff]
    %vm31 = vcmask 130048
    %v33 = vsel %vm31, %v28, 0
    %35 = vmatprep.subr.mxu0 0.0
    %36 = vmatpush1.msra.mxu0 %v29
    %37 = vmatprep.subr.mxu0 0.0
    %38 = vmatpush1.msra.mxu0 %v30
    %39 = vmatprep.subr.mxu0 0.0
    %40 = vmatpush1.msra.mxu0 0.0
    %41 = vmatprep.subr.mxu0 0.0
    %42 = vmatpush1.msra.mxu0 0.0
    %43 = vmatprep.subr.mxu0 0.0
    %44 = vmatpush1.msra.mxu0 0.0
    %45 = vmatprep.subr.mxu0 0.0
    %46 = vmatpush1.msra.mxu0 0.0
    %47 = vmatprep.subr.mxu0 0.0
    %48 = vmatpush1.msra.mxu0 0.0
    %49 = vmatprep.subr.mxu0 0.0
    %50 = vmatpush1.msra.mxu0 0.0
    %51 = vmatprep.subr.mxu0 0.0
    %52 = vmatpush1.msra.mxu0 0.0
    %53 = vmatprep.subr.mxu0 0.0
    %54 = vmatpush1.msra.mxu0 0.0
    %55 = vmatprep.subr.mxu0 0.0
    %56 = vmatpush1.msra.mxu0 0.0
    %57 = vmatprep.subr.mxu0 0.0
    %58 = vmatpush1.msra.mxu0 0.0
    %59 = vmatprep.subr.mxu0 0.0
    %60 = vmatpush1.msra.mxu0 0.0
    %61 = vmatprep.subr.mxu0 0.0
    %62 = vmatpush1.msra.mxu0 0.0
    %63 = vmatprep.subr.mxu0 0.0
    %64 = vmatpush1.msra.mxu0 0.0
    %65 = vmatprep.subr.mxu0 0.0
    %66 = vmatpush1.msra.mxu0 0.0
    %67 = vmatprep.subr.mxu0 0.0
    %68 = vmatpush1.msra.mxu0 0.0
    %69 = vmatprep.subr.mxu0 0.0
    %70 = vmatpush1.msra.mxu0 0.0
    %71 = vmatprep.subr.mxu0 0.0
    %72 = vmatpush1.msra.mxu0 0.0
    %73 = vmatprep.subr.mxu0 0.0
    %74 = vmatpush1.msra.mxu0 0.0
    %75 = vmatprep.subr.mxu0 0.0
    %76 = vmatpush1.msra.mxu0 0.0
    %77 = vmatprep.subr.mxu0 0.0
    %78 = vmatpush1.msra.mxu0 0.0
    %79 = vmatprep.subr.mxu0 0.0
    %80 = vmatpush1.msra.mxu0 0.0
    %81 = vmatprep.subr.mxu0 0.0
    %82 = vmatpush1.msra.mxu0 0.0
    %83 = vmatprep.subr.mxu0 0.0
    %84 = vmatpush1.msra.mxu0 0.0
    %85 = vmatprep.subr.mxu0 0.0
    %86 = vmatpush1.msra.mxu0 0.0
    %87 = vmatprep.subr.mxu0 0.0
    %88 = vmatpush1.msra.mxu0 0.0
    %89 = vmatprep.subr.mxu0 0.0
    %90 = vmatpush1.msra.mxu0 0.0
    %91 = vmatprep.subr.mxu0 0.0
    %92 = vmatpush1.msra.mxu0 0.0
    %93 = vmatprep.subr.mxu0 0.0
    %94 = vmatpush1.msra.mxu0 0.0
    %95 = vmatprep.subr.mxu0 0.0
    %96 = vmatpush1.msra.mxu0 0.0
    %97 = vmatprep.subr.mxu0 0.0
    %98 = vmatpush1.msra.mxu0 0.0
    %99 = vmatprep.mubr.f32.mxu0 0.0
    %100 = vmatmul.mubr.f32.gmra.mrb[0].mxu0 %v33
    %v101 = vpop.f32.mrb[0].mxu0
    %v102 = vadd.f32 0.0, %v101
    %v103 = vpop.f32.mrb[0].mxu0
    %104 = vdwg.mxu0
    %v105 = vld [vmem:[%s0] sm:$0xf]
    %v106 = vld [vmem:[%s4] sm:$0x1]
    %v108 = vlaneseq
    %v109 = vshrl.u32 %v108, 7
    %v110 = vsub.s32 0, %v109
    %v111 = vrot.slane %v106, %v110
    %vm113 = vcmask 31744
    %v115 = vsel %vm113, %v105, 0
    %vm117 = vcmask 1043456
    %v119 = vsel %vm117, %v102, 0
    %121 = vmatprep.subr.mxu0 0.0
    %122 = vmatpush1.msra.mxu0 %v119
    %123 = vmatprep.subr.mxu0 0.0
    %124 = vmatpush1.msra.mxu0 0.0
    %125 = vmatprep.subr.mxu0 0.0
    %126 = vmatpush1.msra.mxu0 0.0
    %127 = vmatprep.subr.mxu0 0.0
    %128 = vmatpush1.msra.mxu0 0.0
    %129 = vmatprep.subr.mxu0 0.0
    %130 = vmatpush1.msra.mxu0 0.0
    %131 = vmatprep.subr.mxu0 0.0
    %132 = vmatpush1.msra.mxu0 0.0
    %133 = vmatprep.subr.mxu0 0.0
    %134 = vmatpush1.msra.mxu0 0.0
    %135 = vmatprep.subr.mxu0 0.0
    %136 = vmatpush1.msra.mxu0 0.0
    %137 = vmatprep.subr.mxu0 0.0
    %138 = vmatpush1.msra.mxu0 0.0
    %139 = vmatprep.subr.mxu0 0.0
    %140 = vmatpush1.msra.mxu0 0.0
    %141 = vmatprep.subr.mxu0 0.0
    %142 = vmatpush1.msra.mxu0 0.0
    %143 = vmatprep.subr.mxu0 0.0
    %144 = vmatpush1.msra.mxu0 0.0
    %145 = vmatprep.subr.mxu0 0.0
    %146 = vmatpush1.msra.mxu0 0.0
    %147 = vmatprep.subr.mxu0 0.0
    %148 = vmatpush1.msra.mxu0 0.0
    %149 = vmatprep.subr.mxu0 0.0
    %150 = vmatpush1.msra.mxu0 0.0
    %151 = vmatprep.subr.mxu0 0.0
    %152 = vmatpush1.msra.mxu0 0.0
    %153 = vmatprep.subr.mxu0 0.0
    %154 = vmatpush1.msra.mxu0 0.0
    %155 = vmatprep.subr.mxu0 0.0
    %156 = vmatpush1.msra.mxu0 0.0
    %157 = vmatprep.subr.mxu0 0.0
    %158 = vmatpush1.msra.mxu0 0.0
    %159 = vmatprep.subr.mxu0 0.0
    %160 = vmatpush1.msra.mxu0 0.0
    %161 = vmatprep.subr.mxu0 0.0
    %162 = vmatpush1.msra.mxu0 0.0
    %163 = vmatprep.subr.mxu0 0.0
    %164 = vmatpush1.msra.mxu0 0.0
    %165 = vmatprep.subr.mxu0 0.0
    %166 = vmatpush1.msra.mxu0 0.0
    %167 = vmatprep.subr.mxu0 0.0
    %168 = vmatpush1.msra.mxu0 0.0
    %169 = vmatprep.subr.mxu0 0.0
    %170 = vmatpush1.msra.mxu0 0.0
    %171 = vmatprep.subr.mxu0 0.0
    %172 = vmatpush1.msra.mxu0 0.0
    %173 = vmatprep.subr.mxu0 0.0
    %174 = vmatpush1.msra.mxu0 0.0
    %175 = vmatprep.subr.mxu0 0.0
    %176 = vmatpush1.msra.mxu0 0.0
    %177 = vmatprep.subr.mxu0 0.0
    %178 = vmatpush1.msra.mxu0 0.0
    %179 = vmatprep.subr.mxu0 0.0
    %180 = vmatpush1.msra.mxu0 0.0
    %181 = vmatprep.subr.mxu0 0.0
    %182 = vmatpush1.msra.mxu0 0.0
    %183 = vmatprep.subr.mxu0 0.0
    %184 = vmatpush1.msra.mxu0 0.0
    %185 = vmatprep.mubr.f32.mxu0 0.0
    %186 = vmatmul.mubr.f32.gmra.mrb[0].mxu0 %v115
    %v187 = vpop.f32.mrb[0].mxu0
    %v188 = vadd.f32 %v111, %v187
    %v189 = vpop.f32.mrb[0].mxu0
    %190 = vdwg.mxu0
    %v191 = vmax.f32 %v188, 0.0
    %vm192 = vcmask 60416
    %193 = vst.msk [vmem:[#allocation2] sm:$0xf] %vm192, %v191
    // Predicated region
    $region22: #{graph_encoder_forward.5} parent=1 // pred_check
      _
    $region23: #{graph_encoder_forward.5} parent=1 // pred_check_branch
      %195 = sbr.rel (0) target = $region25
    $region24: #{graph_encoder_forward.5} parent=1 // pred_region
      %s197 = ssub.s32 64, 64
      %198 = vsyncadd [#allocation3], %s197
      %s200 = sshll.u32 [#allocation2], 4
      %s201 = int_to_ptr.vmem [resolvable:$true] %s200
      %203 = dma.vmem_to_hbm [thread:$0]  %s201, 64, %s5, [#allocation3]
    $region25: #{graph_encoder_forward.5} parent=1 // pred_fallthru
      _
    // Predicated region
    $region26: #{graph_encoder_forward.5} parent=1 // pred_check
      _
    $region27: #{graph_encoder_forward.5} parent=1 // pred_check_branch
      %205 = sbr.rel (0) target = $region29
    $region28: #{graph_encoder_forward.5} parent=1 // pred_region
      %206 = dma.done [#allocation3], 64
    $region29: #{graph_encoder_forward.5} parent=1 // pred_fallthru
      _
    %207 = vsyncpa [#allocation3], 1

</llo_original>
